<compile_context>
chip_gen: v7x
topology: tpu7x:2x2x1
jax: 0.10.0
libtpu: 0.0.40
codegen_flags: <defaults>
</compile_context>

<pallas_src>
import jax
import jax.numpy as jnp
from jax.experimental import pallas as pl
from jax.experimental.pallas import tpu as pltpu


def _round_up(x: int, n: int) -> int:
    return ((x + n - 1) // n) * n


# --------------------------------- kernels ----------------------------------


def ffn_resident_kernel(x_ref, w1_ref, b1_ref, w2_ref, b2_ref, o_ref):
    """Whole pf dim in one pass; weights stay VMEM-resident across row tiles."""
    # x_ref: (tm, hid_p)   w1_ref: (hid_p, pf_p)   b1_ref: (1, pf_p) f32
    # w2_ref: (pf_p, hid_p) b2_ref: (1, hid_p) f32 o_ref:  (tm, hid_p)
    h = jnp.dot(x_ref[...], w1_ref[...], preferred_element_type=jnp.float32)
    h = jnp.maximum(h + b1_ref[...], 0.0)
    # dropout == identity (eval mode)
    out = jnp.dot(h.astype(w2_ref.dtype), w2_ref[...],
                  preferred_element_type=jnp.float32)
    o_ref[...] = (out + b2_ref[...]).astype(o_ref.dtype)


def ffn_chunked_kernel(x_ref, w1_ref, b1_ref, w2_ref, b2_ref, o_ref, acc_ref):
    """pf chunked along trailing 'arbitrary' grid axis with an f32 accumulator."""
    # x_ref: (tm, hid_p)   w1_ref: (hid_p, tk)   b1_ref: (1, tk) f32
    # w2_ref: (tk, hid_p)  b2_ref: (1, hid_p) f32
    # o_ref: (tm, hid_p)   acc_ref: (tm, hid_p) f32 scratch
    k = pl.program_id(1)

    @pl.when(k == 0)
    def _():
        # Initialize the accumulator with the broadcast output bias: removes
        # the (tm, hid) VPU add from the epilogue.
        acc_ref[...] = jnp.broadcast_to(b2_ref[...], acc_ref.shape)

    h = jnp.dot(x_ref[...], w1_ref[...], preferred_element_type=jnp.float32)
    h = jnp.maximum(h + b1_ref[...], 0.0)
    # dropout == identity (eval mode)
    acc_ref[...] += jnp.dot(h.astype(w2_ref.dtype), w2_ref[...],
                            preferred_element_type=jnp.float32)

    @pl.when(k == pl.num_programs(1) - 1)
    def _():
        o_ref[...] = acc_ref[...].astype(o_ref.dtype)


# ------------------------------ planning helpers ----------------------------


def _tpu_gen_config():
    kind = ""
    try:
        kind = jax.devices()[0].device_kind.lower()
    except Exception:
        pass
    if "v7" in kind:
        # 64 MiB VMEM per TensorCore, 2 TCs: want >= 2 row tiles.
        return dict(tm=512, tk=512, budget=44 << 20, phys=60 << 20,
                    prefer_two_row_tiles=True)
    if "v6" in kind:
        # Needs ~650 FLOPs/byte to stay MXU-bound -> large tm; 128 MiB VMEM.
        return dict(tm=1024, tk=512, budget=100 << 20, phys=120 << 20,
                    prefer_two_row_tiles=False)
    if "v5" in kind:
        return dict(tm=256, tk=256, budget=96 << 20, phys=120 << 20,
                    prefer_two_row_tiles=False)
    # Unknown device: conservative defaults.
    return dict(tm=256, tk=256, budget=44 << 20, phys=60 << 20,
                prefer_two_row_tiles=False)


def _vmem_footprint(tm, tk, hid_p, pf_p, cbytes, obytes, resident):
    """Approximate VMEM bytes used by the pipelined kernel."""
    nbuf = 2                                  # default double buffering
    f = nbuf * tm * hid_p * cbytes            # x tile
    f += nbuf * hid_p * tk * cbytes           # W1 sliver
    f += nbuf * 8 * tk * 4                    # b1 (sublane-padded, f32)
    f += nbuf * tk * hid_p * cbytes           # W2 sliver
    f += nbuf * 8 * hid_p * 4                 # b2
    f += nbuf * tm * hid_p * obytes           # out tile
    f += tm * tk * (4 + cbytes)               # f32 `h` temp + compute-dtype cast
    if not resident:
        f += tm * hid_p * 4                   # f32 accumulator scratch
    return f


def _plan(m, hid_p, pf_p, cbytes, obytes):
    cfg = _tpu_gen_config()
    tm = max(8, min(cfg["tm"], _round_up(m, 8)))
    if cfg["prefer_two_row_tiles"] and m > 8 and _round_up(m, tm) // tm < 2:
        tm = max(8, _round_up((m + 1) // 2, 8))   # let both TCs get a row tile

    budget = cfg["budget"]
    q = pf_p // 128
    divisors = [d * 128 for d in range(1, q + 1) if q % d == 0]  # valid pf chunks

    while True:
        # Option A: weights fully VMEM-resident, single pass over pf.
        if _vmem_footprint(tm, pf_p, hid_p, pf_p, cbytes, obytes, True) <= budget:
            return dict(tm=tm, tk=pf_p, resident=True, cfg=cfg)
        # Option B: chunk pf, biggest chunk that fits.
        for tk in sorted([d for d in divisors if d <= cfg["tk"]], reverse=True):
            if _vmem_footprint(tm, tk, hid_p, pf_p, cbytes, obytes, False) <= budget:
                return dict(tm=tm, tk=tk, resident=False, cfg=cfg)
        if tm <= 64:
            return dict(tm=tm, tk=divisors[0], resident=False, cfg=cfg)
        tm = max(64, _round_up(tm // 2, 8))


# --------------------------------- wrappers ----------------------------------


def prepare_ffn_params(w1t, b1, w2t, b2, *, compute_dtype=jnp.bfloat16):
    """Pad + cast the FFN weights once (hoisted out of the per-call hot path).

    w1t: (hid, pf) = fc_1.weight.T   b1: (pf,)
    w2t: (pf, hid) = fc_2.weight.T   b2: (hid,)
    """
    hid, pf = w1t.shape
    hid_p = _round_up(hid, 128)
    pf_p = _round_up(pf, 128)
    w1p = jnp.pad(w1t.astype(compute_dtype), ((0, hid_p - hid), (0, pf_p - pf)))
    b1p = jnp.pad(b1.astype(jnp.float32).reshape(1, pf), ((0, 0), (0, pf_p - pf)))
    w2p = jnp.pad(w2t.astype(compute_dtype), ((0, pf_p - pf), (0, hid_p - hid)))
    b2p = jnp.pad(b2.astype(jnp.float32).reshape(1, hid), ((0, 0), (0, hid_p - hid)))
    return w1p, b1p, w2p, b2p


def positionwise_ffn(x, params, *, compute_dtype=jnp.bfloat16, out_dtype=None):
    """x: (batch, seq, hid).  params: output of prepare_ffn_params()."""
    w1p, b1p, w2p, b2p = params
    hid_p, pf_p = w1p.shape
    batch, seq, hid = x.shape
    m = batch * seq
    out_dtype = jnp.dtype(out_dtype or x.dtype)
    cbytes = jnp.dtype(compute_dtype).itemsize
    obytes = out_dtype.itemsize

    plan = _plan(m, hid_p, pf_p, cbytes, obytes)
    tm, tk, resident, cfg = plan["tm"], plan["tk"], plan["resident"], plan["cfg"]
    m_p = _round_up(m, tm)
    n_row_tiles = m_p // tm

    # Only the activations are padded per call (skipped when already aligned).
    x2d = x.reshape(m, hid).astype(compute_dtype)
    if m_p != m or hid_p != hid:
        x2d = jnp.pad(x2d, ((0, m_p - m), (0, hid_p - hid)))

    # Advisory cost: the chunked plan re-streams W1/W2 once per row tile.
    w_bytes = (w1p.size + w2p.size) * cbytes + (b1p.size + b2p.size) * 4
    weight_passes = 1 if resident else n_row_tiles
    cost = pl.CostEstimate(
        flops=4 * m_p * hid_p * pf_p,          # two matmuls: 2*m*hid*pf each
        transcendentals=0,
        bytes_accessed=m_p * hid_p * (cbytes + obytes) + weight_passes * w_bytes,
    )

    footprint = _vmem_footprint(tm, tk, hid_p, pf_p, cbytes, obytes, resident)
    vmem_limit = int(min(cfg["phys"], max(32 << 20, int(footprint * 1.4))))

    if resident:
        grid = (n_row_tiles,)
        in_specs = [
            pl.BlockSpec((tm, hid_p), lambda i: (i, 0)),      # x row tile
            pl.BlockSpec((hid_p, pf_p), lambda i: (0, 0)),    # W1^T (resident)
            pl.BlockSpec((1, pf_p), lambda i: (0, 0)),        # b1
            pl.BlockSpec((pf_p, hid_p), lambda i: (0, 0)),    # W2^T (resident)
            pl.BlockSpec((1, hid_p), lambda i: (0, 0)),       # b2
        ]
        out_specs = pl.BlockSpec((tm, hid_p), lambda i: (i, 0))
        scratch_shapes = []
        kernel = ffn_resident_kernel
        dim_sem = ("parallel",)
    else:
        grid = (n_row_tiles, pf_p // tk)
        in_specs = [
            pl.BlockSpec((tm, hid_p), lambda i, k: (i, 0)),   # x row tile
            pl.BlockSpec((hid_p, tk), lambda i, k: (0, k)),   # W1^T pf-sliver
            pl.BlockSpec((1, tk), lambda i, k: (0, k)),       # b1 pf-sliver
            pl.BlockSpec((tk, hid_p), lambda i, k: (k, 0)),   # W2^T pf-sliver
            pl.BlockSpec((1, hid_p), lambda i, k: (0, 0)),    # b2
        ]
        out_specs = pl.BlockSpec((tm, hid_p), lambda i, k: (i, 0))
        scratch_shapes = [pltpu.VMEM((tm, hid_p), jnp.float32)]
        kernel = ffn_chunked_kernel
        dim_sem = ("parallel", "arbitrary")

    out2d = pl.pallas_call(
        kernel,
        out_shape=jax.ShapeDtypeStruct((m_p, hid_p), out_dtype),
        grid_spec=pltpu.PrefetchScalarGridSpec(
            num_scalar_prefetch=0,
            grid=grid,
            in_specs=in_specs,
            out_specs=out_specs,
            scratch_shapes=scratch_shapes,
        ),
        compiler_params=pltpu.CompilerParams(
            dimension_semantics=dim_sem,
            vmem_limit_bytes=vmem_limit,
        ),
        cost_estimate=cost,
    )(x2d, w1p, b1p, w2p, b2p)

    return out2d[:m, :hid].reshape(batch, seq, hid)


def _reference(x, w1t, b1, w2t, b2):
    h = jnp.maximum(x @ w1t + b1, 0.0)
    return h @ w2t + b2


if __name__ == "__main__":
    # Small shapes implied by the module: (batch, seq, hid_dim) with pf_dim hidden.
    batch, seq, hid_dim, pf_dim = 2, 8, 32, 64
    dtype = jnp.float32

    key = jax.random.PRNGKey(0)
    kx, kw1, kb1, kw2, kb2 = jax.random.split(key, 5)

    x = jax.random.normal(kx, (batch, seq, hid_dim), dtype=dtype)

    # Deterministic init mimicking nn.Linear defaults (uniform ±1/sqrt(fan_in)).
    lim1 = 1.0 / jnp.sqrt(jnp.float32(hid_dim))
    lim2 = 1.0 / jnp.sqrt(jnp.float32(pf_dim))
    # PyTorch fc_1.weight is (pf, hid); we store its transpose (hid, pf).
    w1t = jax.random.uniform(kw1, (hid_dim, pf_dim), dtype, -lim1, lim1)
    b1 = jax.random.uniform(kb1, (pf_dim,), dtype, -lim1, lim1)
    # PyTorch fc_2.weight is (hid, pf); we store its transpose (pf, hid).
    w2t = jax.random.uniform(kw2, (pf_dim, hid_dim), dtype, -lim2, lim2)
    b2 = jax.random.uniform(kb2, (hid_dim,), dtype, -lim2, lim2)

    # Hoisted out of the hot path: pad + cast the weights once.
    params = prepare_ffn_params(w1t, b1, w2t, b2, compute_dtype=jnp.bfloat16)

    ffn = jax.jit(positionwise_ffn)
    out = jax.block_until_ready(ffn(x, params))

    ref = _reference(x, w1t, b1, w2t, b2)
    assert out.shape == (batch, seq, hid_dim)
    assert out.dtype == x.dtype
    # bf16 MXU matmuls with f32 accumulation: loose tolerance vs the f32 reference.
    assert jnp.allclose(out, ref, atol=5e-2, rtol=5e-2), float(
        jnp.max(jnp.abs(out - ref)))

    print("KERNEL_OK")
</pallas_src>

<mosaic_0001>
module attributes {stable_mosaic.version = 11 : i64} {
  func.func @ffn_resident_kernel(%arg0: i32, %arg1: memref<16x128xbf16, #tpu.memory_space<vmem>>, %arg2: memref<128x128xbf16, #tpu.memory_space<vmem>>, %arg3: memref<1x128xf32, #tpu.memory_space<vmem>>, %arg4: memref<128x128xbf16, #tpu.memory_space<vmem>>, %arg5: memref<1x128xf32, #tpu.memory_space<vmem>>, %arg6: memref<16x128xf32, #tpu.memory_space<vmem>>) attributes {dimension_semantics = [#tpu.dimension_semantics<parallel>], iteration_bounds = array<i64: 1>, scalar_prefetch = 0 : i64, scratch_operands = 0 : i64, tpu.core_type = #tpu.core_type<tc>, window_params = [{transform_indices = @transform_0, window_bounds = array<i64: 16, 128>}, {pipeline_mode = #tpu.pipeline_mode<synchronous>, transform_indices = @transform_1, window_bounds = array<i64: 128, 128>}, {pipeline_mode = #tpu.pipeline_mode<synchronous>, transform_indices = @transform_2, window_bounds = array<i64: 1, 128>}, {pipeline_mode = #tpu.pipeline_mode<synchronous>, transform_indices = @transform_3, window_bounds = array<i64: 128, 128>}, {pipeline_mode = #tpu.pipeline_mode<synchronous>, transform_indices = @transform_4, window_bounds = array<i64: 1, 128>}, {transform_indices = @transform_5, window_bounds = array<i64: 16, 128>}]} {
    %c0 = arith.constant 0 : index
    %c0_0 = arith.constant 0 : index
    %0 = vector.load %arg1[%c0, %c0_0] : memref<16x128xbf16, #tpu.memory_space<vmem>>, vector<16x128xbf16>
    %c0_1 = arith.constant 0 : index
    %c0_2 = arith.constant 0 : index
    %1 = vector.load %arg2[%c0_1, %c0_2] : memref<128x128xbf16, #tpu.memory_space<vmem>>, vector<128x128xbf16>
    %cst = arith.constant dense<0.000000e+00> : vector<16x128xf32>
    %2 = tpu.matmul %0, %1, %cst {dimension_numbers = #tpu.dot_dimension_numbers<[1], [0], [0], [1], [0, 0, 1, 1], [], []>} : vector<16x128xbf16>, vector<128x128xbf16>, vector<16x128xf32> -> vector<16x128xf32>
    %c0_3 = arith.constant 0 : index
    %c0_4 = arith.constant 0 : index
    %3 = vector.load %arg3[%c0_3, %c0_4] : memref<1x128xf32, #tpu.memory_space<vmem>>, vector<1x128xf32>
    %4 = vector.broadcast %3 : vector<1x128xf32> to vector<16x128xf32>
    %5 = arith.addf %2, %4 : vector<16x128xf32>
    %cst_5 = arith.constant 0.000000e+00 : f32
    %6 = vector.broadcast %cst_5 : f32 to vector<16x128xf32>
    %7 = arith.maximumf %5, %6 : vector<16x128xf32>
    %8 = arith.truncf %7 : vector<16x128xf32> to vector<16x128xbf16>
    %c0_6 = arith.constant 0 : index
    %c0_7 = arith.constant 0 : index
    %9 = vector.load %arg4[%c0_6, %c0_7] : memref<128x128xbf16, #tpu.memory_space<vmem>>, vector<128x128xbf16>
    %cst_8 = arith.constant dense<0.000000e+00> : vector<16x128xf32>
    %10 = tpu.matmul %8, %9, %cst_8 {dimension_numbers = #tpu.dot_dimension_numbers<[1], [0], [0], [1], [0, 0, 1, 1], [], []>} : vector<16x128xbf16>, vector<128x128xbf16>, vector<16x128xf32> -> vector<16x128xf32>
    %c0_9 = arith.constant 0 : index
    %c0_10 = arith.constant 0 : index
    %11 = vector.load %arg5[%c0_9, %c0_10] : memref<1x128xf32, #tpu.memory_space<vmem>>, vector<1x128xf32>
    %12 = vector.broadcast %11 : vector<1x128xf32> to vector<16x128xf32>
    %13 = arith.addf %10, %12 : vector<16x128xf32>
    %c0_11 = arith.constant 0 : index
    %c0_12 = arith.constant 0 : index
    %14 = vector.load %arg6[%c0_11, %c0_12] : memref<16x128xf32, #tpu.memory_space<vmem>>, vector<16x128xf32>
    tpu.vector_store %arg6[%c0_11, %c0_12], %13 {strides = array<i32>} : memref<16x128xf32, #tpu.memory_space<vmem>>, vector<16x128xf32>,
    return
  }
  func.func @transform_0(%arg0: i32) -> (i32, i32) {
    %c0_i32 = arith.constant 0 : i32
    %c0_i32_0 = arith.constant 0 : i32
    return %arg0, %c0_i32 : i32, i32
  }
  func.func @transform_1(%arg0: i32) -> (i32, i32) {
    %c0_i32 = arith.constant 0 : i32
    %c0_i32_0 = arith.constant 0 : i32
    %c0_i32_1 = arith.constant 0 : i32
    return %c0_i32, %c0_i32_0 : i32, i32
  }
  func.func @transform_2(%arg0: i32) -> (i32, i32) {
    %c0_i32 = arith.constant 0 : i32
    %c0_i32_0 = arith.constant 0 : i32
    %c0_i32_1 = arith.constant 0 : i32
    return %c0_i32, %c0_i32_0 : i32, i32
  }
  func.func @transform_3(%arg0: i32) -> (i32, i32) {
    %c0_i32 = arith.constant 0 : i32
    %c0_i32_0 = arith.constant 0 : i32
    %c0_i32_1 = arith.constant 0 : i32
    return %c0_i32, %c0_i32_0 : i32, i32
  }
  func.func @transform_4(%arg0: i32) -> (i32, i32) {
    %c0_i32 = arith.constant 0 : i32
    %c0_i32_0 = arith.constant 0 : i32
    %c0_i32_1 = arith.constant 0 : i32
    return %c0_i32, %c0_i32_0 : i32, i32
  }
  func.func @transform_5(%arg0: i32) -> (i32, i32) {
    %c0_i32 = arith.constant 0 : i32
    %c0_i32_0 = arith.constant 0 : i32
    return %arg0, %c0_i32 : i32, i32
  }
}

</mosaic_0001>

<llo_original>
// kernel: positionwise_ffn.1
$region0: #{positionwise_ffn.1}
  #allocation0 [shape = 'u32[]', space=smem, size = 0x4, offset = 0x4, fixed_abs, tag = 'smem constant byte address 0x4 - core index']
  #allocation1 [shape = 'u32[144,128]{1,0:T(1,128)}', space=vmem, size = 0x12000, scoped, tag = 'internal scratch']
  %s0 = inlined_call_operand.vmem [shape: bf16[16,128], index: 0, kind: input, shape index: {}]
  %s1 = inlined_call_operand.hbm [shape: bf16[128,128], index: 1, kind: input, shape index: {}]
  %s2 = inlined_call_operand.vmem [shape: f32[1,128], index: 2, kind: input, shape index: {}]
  %s3 = inlined_call_operand.hbm [shape: bf16[128,128], index: 3, kind: input, shape index: {}]
  %s4 = inlined_call_operand.vmem [shape: f32[1,128], index: 4, kind: input, shape index: {}]
  %s5 = inlined_call_operand.vmem [shape: f32[16,128], index: 5, kind: output, shape index: {}]
  %s6 = sld [smem:[#allocation0]]
  $region38: #{positionwise_ffn.1} parent=0
    _
  %s8 = ssub.s32 1, %s6
  %s9 = scalar_select 0, %s8, %s6
  $region1: #{positionwise_ffn.1} parent=0
    #allocation2 [shape = 'u8[32768]{0}', space=vmem, size = 0x8000, scoped, tag = 'input window, operand 1, single buffered']
    #allocation3 [shape = 's32[1]{0}', space=sflag, size = 0x4, scoped, tag = 'scoped memory for positionwise_ffn.1']
    #allocation4 [shape = 'u8[32768]{0}', space=vmem, size = 0x8000, scoped, tag = 'input window, operand 3, single buffered']
    #allocation5 [shape = 's32[1]{0}', space=sflag, size = 0x4, scoped, tag = 'scoped memory for positionwise_ffn.1']
    %10 = vsyncpa [#allocation3], 0
    %11 = vsyncpa [#allocation5], 0
    // Predicated region
    $region2: #{positionwise_ffn.1} parent=1 // pred_check
      _
    $region3: #{positionwise_ffn.1} parent=1 // pred_check_branch
      %13 = sbr.rel (0) target = $region5
    $region4: #{positionwise_ffn.1} parent=1 // pred_region
      _
    $region5: #{positionwise_ffn.1} parent=1 // pred_fallthru
      _
    // Predicated region
    $region6: #{positionwise_ffn.1} parent=1 // pred_check
      _
    $region7: #{positionwise_ffn.1} parent=1 // pred_check_branch
      %15 = sbr.rel (0) target = $region9
    $region8: #{positionwise_ffn.1} parent=1 // pred_region
      %s17 = ssub.s32 1024, 1024
      %18 = vsyncadd [#allocation3], %s17
      %s19 = sshll.u32 [#allocation2], 4
      %s20 = int_to_ptr.vmem [resolvable:$true] %s19
      %25 = dma.hbm_to_vmem [thread:$0]  %s1, 1024, %s20, [#allocation3], 64, 64, 4
    $region9: #{positionwise_ffn.1} parent=1 // pred_fallthru
      _
    // Predicated region
    $region10: #{positionwise_ffn.1} parent=1 // pred_check
      _
    $region11: #{positionwise_ffn.1} parent=1 // pred_check_branch
      %27 = sbr.rel (0) target = $region13
    $region12: #{positionwise_ffn.1} parent=1 // pred_region
      _
    $region13: #{positionwise_ffn.1} parent=1 // pred_fallthru
      _
    // Predicated region
    $region14: #{positionwise_ffn.1} parent=1 // pred_check
      _
    $region15: #{positionwise_ffn.1} parent=1 // pred_check_branch
      %29 = sbr.rel (0) target = $region17
    $region16: #{positionwise_ffn.1} parent=1 // pred_region
      %s31 = ssub.s32 1024, 1024
      %32 = vsyncadd [#allocation5], %s31
      %s33 = sshll.u32 [#allocation4], 4
      %s34 = int_to_ptr.vmem [resolvable:$true] %s33
      %39 = dma.hbm_to_vmem [thread:$0]  %s3, 1024, %s34, [#allocation5], 64, 64, 4
    $region17: #{positionwise_ffn.1} parent=1 // pred_fallthru
      _
    // Predicated region
    $region18: #{positionwise_ffn.1} parent=1 // pred_check
      _
    $region19: #{positionwise_ffn.1} parent=1 // pred_check_branch
      %41 = sbr.rel (0) target = $region21
    $region20: #{positionwise_ffn.1} parent=1 // pred_region
      _
    $region21: #{positionwise_ffn.1} parent=1 // pred_fallthru
      _
    // Predicated region
    $region22: #{positionwise_ffn.1} parent=1 // pred_check
      _
    $region23: #{positionwise_ffn.1} parent=1 // pred_check_branch
      %43 = sbr.rel (0) target = $region25
    $region24: #{positionwise_ffn.1} parent=1 // pred_region
      %44 = dma.done [#allocation3], 1024
    $region25: #{positionwise_ffn.1} parent=1 // pred_fallthru
      _
    // Predicated region
    $region26: #{positionwise_ffn.1} parent=1 // pred_check
      _
    $region27: #{positionwise_ffn.1} parent=1 // pred_check_branch
      %46 = sbr.rel (0) target = $region29
    $region28: #{positionwise_ffn.1} parent=1 // pred_region
      %47 = dma.done [#allocation5], 1024
    $region29: #{positionwise_ffn.1} parent=1 // pred_fallthru
      _
    %v49 = vld [vmem:[%s0] sm:$0xf]
    %v50 = vld [vmem:[%s0 + $0x4] sm:$0xf]
    %v51 = vld [vmem:[#allocation2] sm:$0xf]
    %v52 = vld [vmem:[#allocation2 + $0x4] sm:$0xf]
    %v53 = vld [vmem:[#allocation2 + $0x8] sm:$0xf]
    %v54 = vld [vmem:[#allocation2 + $0xc] sm:$0xf]
    %v55 = vld [vmem:[#allocation2 + $0x10] sm:$0xf]
    %v56 = vld [vmem:[#allocation2 + $0x14] sm:$0xf]
    %v57 = vld [vmem:[#allocation2 + $0x18] sm:$0xf]
    %v58 = vld [vmem:[#allocation2 + $0x1c] sm:$0xf]
    %v59 = vld [vmem:[#allocation2 + $0x20] sm:$0xf]
    %v60 = vld [vmem:[#allocation2 + $0x24] sm:$0xf]
    %v61 = vld [vmem:[#allocation2 + $0x28] sm:$0xf]
    %v62 = vld [vmem:[#allocation2 + $0x2c] sm:$0xf]
    %v63 = vld [vmem:[#allocation2 + $0x30] sm:$0xf]
    %v64 = vld [vmem:[#allocation2 + $0x34] sm:$0xf]
    %v65 = vld [vmem:[#allocation2 + $0x38] sm:$0xf]
    %v66 = vld [vmem:[#allocation2 + $0x3c] sm:$0xf]
    %v67 = vld [vmem:[%s2] sm:$0x1]
    %v69 = vlaneseq
    %v70 = vshrl.u32 %v69, 7
    %v71 = vsub.s32 0, %v70
    %v72 = vrot.slane %v67, %v71
    %v76 = vunpack.c.l.b16 %v49
    %v77 = vunpack.c.l.b16 %v50
    %v78 = vpack.c.b16 %v77, %v76
    %v96 = vunpack.c.l.b16 %v51
    %v97 = vunpack.c.l.b16 %v52
    %v98 = vunpack.c.l.b16 %v53
    %v99 = vunpack.c.l.b16 %v54
    %v100 = vunpack.c.l.b16 %v55
    %v101 = vunpack.c.l.b16 %v56
    %v102 = vunpack.c.l.b16 %v57
    %v103 = vunpack.c.l.b16 %v58
    %v104 = vunpack.c.l.b16 %v59
    %v105 = vunpack.c.l.b16 %v60
    %v106 = vunpack.c.l.b16 %v61
    %v107 = vunpack.c.l.b16 %v62
    %v108 = vunpack.c.l.b16 %v63
    %v109 = vunpack.c.l.b16 %v64
    %v110 = vunpack.c.l.b16 %v65
    %v111 = vunpack.c.l.b16 %v66
    %v112 = vpack.c.b16 %v97, %v96
    %v113 = vpack.c.b16 %v99, %v98
    %v114 = vpack.c.b16 %v101, %v100
    %v115 = vpack.c.b16 %v103, %v102
    %v116 = vpack.c.b16 %v105, %v104
    %v117 = vpack.c.b16 %v107, %v106
    %v118 = vpack.c.b16 %v109, %v108
    %v119 = vpack.c.b16 %v111, %v110
    %128 = vmatprep.subr.bf16.mxu0 0
    %129 = vmatpush1.bf16.msra.mxu0 %v112
    %130 = vmatprep.subr.bf16.mxu0 0
    %131 = vmatpush1.bf16.msra.mxu0 %v113
    %132 = vmatprep.subr.bf16.mxu0 0
    %133 = vmatpush1.bf16.msra.mxu0 %v114
    %134 = vmatprep.subr.bf16.mxu0 0
    %135 = vmatpush1.bf16.msra.mxu0 %v115
    %136 = vmatprep.subr.bf16.mxu0 0
    %137 = vmatpush1.bf16.msra.mxu0 %v116
    %138 = vmatprep.subr.bf16.mxu0 0
    %139 = vmatpush1.bf16.msra.mxu0 %v117
    %140 = vmatprep.subr.bf16.mxu0 0
    %141 = vmatpush1.bf16.msra.mxu0 %v118
    %142 = vmatprep.subr.bf16.mxu0 0
    %143 = vmatpush1.bf16.msra.mxu0 %v119
    %144 = vmatprep.subr.bf16.mxu0 0
    %145 = vmatpush1.bf16.msra.mxu0 0
    %146 = vmatprep.subr.bf16.mxu0 0
    %147 = vmatpush1.bf16.msra.mxu0 0
    %148 = vmatprep.subr.bf16.mxu0 0
    %149 = vmatpush1.bf16.msra.mxu0 0
    %150 = vmatprep.subr.bf16.mxu0 0
    %151 = vmatpush1.bf16.msra.mxu0 0
    %152 = vmatprep.subr.bf16.mxu0 0
    %153 = vmatpush1.bf16.msra.mxu0 0
    %154 = vmatprep.subr.bf16.mxu0 0
    %155 = vmatpush1.bf16.msra.mxu0 0
    %156 = vmatprep.subr.bf16.mxu0 0
    %157 = vmatpush1.bf16.msra.mxu0 0
    %158 = vmatprep.subr.bf16.mxu0 0
    %159 = vmatpush1.bf16.msra.mxu0 0
    %160 = vmatprep.mubr.bf16.mxu0 0
    %161 = vmatmul.mubr.bf16.gmra.mrb[0].mxu0 %v78
    %v162 = vpop.f32.mrb[0].mxu0
    %v163 = vadd.f32 %v72, %v162
    %v164 = vpop.f32.mrb[0].mxu0
    %v165 = vpop.f32.mrb[0].mxu0
    %v166 = vadd.f32 %v72, %v165
    %v167 = vpop.f32.mrb[0].mxu0
    %168 = vdwg.mxu0
    %v169 = vmax.f32 %v163, 0.0
    %v170 = vmax.f32 %v166, 0.0
    %v171 = vpack.c.bf16 %v170, %v169
    %v172 = vld [vmem:[#allocation4] sm:$0xf]
    %v173 = vld [vmem:[#allocation4 + $0x4] sm:$0xf]
    %v174 = vld [vmem:[#allocation4 + $0x8] sm:$0xf]
    %v175 = vld [vmem:[#allocation4 + $0xc] sm:$0xf]
    %v176 = vld [vmem:[#allocation4 + $0x10] sm:$0xf]
    %v177 = vld [vmem:[#allocation4 + $0x14] sm:$0xf]
    %v178 = vld [vmem:[#allocation4 + $0x18] sm:$0xf]
    %v179 = vld [vmem:[#allocation4 + $0x1c] sm:$0xf]
    %v180 = vld [vmem:[#allocation4 + $0x20] sm:$0xf]
    %v181 = vld [vmem:[#allocation4 + $0x24] sm:$0xf]
    %v182 = vld [vmem:[#allocation4 + $0x28] sm:$0xf]
    %v183 = vld [vmem:[#allocation4 + $0x2c] sm:$0xf]
    %v184 = vld [vmem:[#allocation4 + $0x30] sm:$0xf]
    %v185 = vld [vmem:[#allocation4 + $0x34] sm:$0xf]
    %v186 = vld [vmem:[#allocation4 + $0x38] sm:$0xf]
    %v187 = vld [vmem:[#allocation4 + $0x3c] sm:$0xf]
    %v188 = vld [vmem:[%s4] sm:$0x1]
    %v190 = vlaneseq
    %v191 = vshrl.u32 %v190, 7
    %v192 = vsub.s32 0, %v191
    %v193 = vrot.slane %v188, %v192
    %v211 = vunpack.c.l.b16 %v172
    %v212 = vunpack.c.l.b16 %v173
    %v213 = vunpack.c.l.b16 %v174
    %v214 = vunpack.c.l.b16 %v175
    %v215 = vunpack.c.l.b16 %v176
    %v216 = vunpack.c.l.b16 %v177
    %v217 = vunpack.c.l.b16 %v178
    %v218 = vunpack.c.l.b16 %v179
    %v219 = vunpack.c.l.b16 %v180
    %v220 = vunpack.c.l.b16 %v181
    %v221 = vunpack.c.l.b16 %v182
    %v222 = vunpack.c.l.b16 %v183
    %v223 = vunpack.c.l.b16 %v184
    %v224 = vunpack.c.l.b16 %v185
    %v225 = vunpack.c.l.b16 %v186
    %v226 = vunpack.c.l.b16 %v187
    %v227 = vpack.c.b16 %v212, %v211
    %v228 = vpack.c.b16 %v214, %v213
    %v229 = vpack.c.b16 %v216, %v215
    %v230 = vpack.c.b16 %v218, %v217
    %v231 = vpack.c.b16 %v220, %v219
    %v232 = vpack.c.b16 %v222, %v221
    %v233 = vpack.c.b16 %v224, %v223
    %v234 = vpack.c.b16 %v226, %v225
    %243 = vmatprep.subr.bf16.mxu0 0
    %244 = vmatpush1.bf16.msra.mxu0 %v227
    %245 = vmatprep.subr.bf16.mxu0 0
    %246 = vmatpush1.bf16.msra.mxu0 %v228
    %247 = vmatprep.subr.bf16.mxu0 0
    %248 = vmatpush1.bf16.msra.mxu0 %v229
    %249 = vmatprep.subr.bf16.mxu0 0
    %250 = vmatpush1.bf16.msra.mxu0 %v230
    %251 = vmatprep.subr.bf16.mxu0 0
    %252 = vmatpush1.bf16.msra.mxu0 %v231
    %253 = vmatprep.subr.bf16.mxu0 0
    %254 = vmatpush1.bf16.msra.mxu0 %v232
    %255 = vmatprep.subr.bf16.mxu0 0
    %256 = vmatpush1.bf16.msra.mxu0 %v233
    %257 = vmatprep.subr.bf16.mxu0 0
    %258 = vmatpush1.bf16.msra.mxu0 %v234
    %259 = vmatprep.subr.bf16.mxu0 0
    %260 = vmatpush1.bf16.msra.mxu0 0
    %261 = vmatprep.subr.bf16.mxu0 0
    %262 = vmatpush1.bf16.msra.mxu0 0
    %263 = vmatprep.subr.bf16.mxu0 0
    %264 = vmatpush1.bf16.msra.mxu0 0
    %265 = vmatprep.subr.bf16.mxu0 0
    %266 = vmatpush1.bf16.msra.mxu0 0
    %267 = vmatprep.subr.bf16.mxu0 0
    %268 = vmatpush1.bf16.msra.mxu0 0
    %269 = vmatprep.subr.bf16.mxu0 0
    %270 = vmatpush1.bf16.msra.mxu0 0
    %271 = vmatprep.subr.bf16.mxu0 0
    %272 = vmatpush1.bf16.msra.mxu0 0
    %273 = vmatprep.subr.bf16.mxu0 0
    %274 = vmatpush1.bf16.msra.mxu0 0
    %275 = vmatprep.mubr.bf16.mxu0 0
    %276 = vmatmul.mubr.bf16.gmra.mrb[0].mxu0 %v171
    %v277 = vpop.f32.mrb[0].mxu0
    %v278 = vadd.f32 %v193, %v277
    %v279 = vpop.f32.mrb[0].mxu0
    %v280 = vpop.f32.mrb[0].mxu0
    %v281 = vadd.f32 %v193, %v280
    %v282 = vpop.f32.mrb[0].mxu0
    %283 = vdwg.mxu0
    %284 = vst [vmem:[%s5] sm:$0xff] %v278
    %285 = vst [vmem:[%s5 + $0x8] sm:$0xff] %v281
    // Predicated region
    $region30: #{positionwise_ffn.1} parent=1 // pred_check
      _
    $region31: #{positionwise_ffn.1} parent=1 // pred_check_branch
      %287 = sbr.rel (0) target = $region33
    $region32: #{positionwise_ffn.1} parent=1 // pred_region
      _
    $region33: #{positionwise_ffn.1} parent=1 // pred_fallthru
      _
    // Predicated region
    $region34: #{positionwise_ffn.1} parent=1 // pred_check
      _
    $region35: #{positionwise_ffn.1} parent=1 // pred_check_branch
      %289 = sbr.rel (0) target = $region37
    $region36: #{positionwise_ffn.1} parent=1 // pred_region
      _
    $region37: #{positionwise_ffn.1} parent=1 // pred_fallthru
      _
    %290 = vsyncpa [#allocation3], 1
    %291 = vsyncpa [#allocation5], 1

</llo_original>
